<compile_context>
chip_gen: v5e
topology: v5e:2x2
jax: 0.10.0
libtpu: 0.0.40
codegen_flags: <defaults>
</compile_context>

<pallas_src>
import functools
import math
import random

import numpy as np
import jax
import jax.numpy as jnp
from jax.experimental import pallas as pl
from jax.experimental.pallas import tpu as pltpu

# ------------------------- small config consistent with the module ----------
VOCAB = 128            # lm_head out_features (original_layer.weight.size(0))
HIDDEN = 32            # lm_head in_features  (original_layer.weight.size(1))
BATCH = 2
SEQ = 8
LORA_RANK = 4
LORA_ALPHA = 2 * LORA_RANK
N_SUB_HYPERNET = 1
CHUNK_SIZE = 80
QNN_DEPTH = 2
OUT_DIM_MPS = 32
LANE = 128             # TPU lane width; used to pad the fc1 output lane-dense

GEN_LEN = VOCAB * LORA_RANK + LORA_RANK * HIDDEN            # 640
WEIGHT_LENGTH = int(np.ceil(GEN_LEN * 1 / N_SUB_HYPERNET))  # 640
HYPER_BATCH = int(np.ceil(WEIGHT_LENGTH / CHUNK_SIZE))      # 8
N_QUBIT = int(np.ceil(np.log2(HYPER_BATCH)))                # 3

# The in-kernel mean subtraction assumes the flattened fc1 output covers exactly
# the WEIGHT_LENGTH generated weights (true for this configuration).
assert HYPER_BATCH * CHUNK_SIZE == WEIGHT_LENGTH


# ------------------------------ Pallas kernels -------------------------------
def _hypernet_kernel(x_ref,
                     w0, b0, w1, b1, w2, b2, w3, b3, w4, b4, w5, b5, w6, b6,
                     wf, bf, o_ref, *, inv_n_real):
    # Fused MappingModel (7 linears, no activations) + dropout(p=0) + fc1,
    # followed by the per-hypernet mean subtraction.
    # All weights are pre-transposed to (in, out); biases are (1, out).
    h = x_ref[...]                                             # (8, N_QUBIT+1)
    for w_ref, b_ref in ((w0, b0), (w1, b1), (w2, b2), (w3, b3),
                         (w4, b4), (w5, b5), (w6, b6)):
        h = jnp.dot(h, w_ref[...], preferred_element_type=jnp.float32) + b_ref[...]
    # fc1, zero-padded on the out dim (80 -> 128) so the HBM store is lane-dense.
    h = jnp.dot(h, wf[...], preferred_element_type=jnp.float32) + bf[...]  # (8,128)
    # Padded columns are exactly zero (zero weights + zero bias), so the full-tile
    # sum equals the sum over the WEIGHT_LENGTH real elements.
    mean = jnp.sum(h) * inv_n_real
    o_ref[...] = h - mean


def fused_hypernet(combined, mapping_t, fc1_w_pad, fc1_b_pad):
    """One pallas_call for the whole hyper-network MLP chain."""
    args = [combined]
    for (w_t, b) in mapping_t:
        args += [w_t, b]
    args += [fc1_w_pad, fc1_b_pad]
    return pl.pallas_call(
        functools.partial(_hypernet_kernel,
                          inv_n_real=1.0 / float(WEIGHT_LENGTH)),
        out_shape=jax.ShapeDtypeStruct((HYPER_BATCH, LANE), jnp.float32),
        in_specs=[pl.BlockSpec(memory_space=pltpu.MemorySpace.VMEM)] * len(args),
        out_specs=pl.BlockSpec(memory_space=pltpu.MemorySpace.VMEM),
    )(*args)


def _lora_head_kernel(x_ref, wht_ref, bt_ref, at_ref, o_ref, *, scale):
    # logits = x @ W_head^T + scale * ((x @ B^T) @ A^T)
    # W_head^T (H,V), B^T (H,r), A^T (r,V) are pre-transposed in the wrapper, so
    # no transpose is materialized in-kernel. Scale is folded into the tiny
    # (M, r) low-rank intermediate.
    x = x_ref[...]                                                         # (M, H)
    base = jnp.dot(x, wht_ref[...], preferred_element_type=jnp.float32)    # (M, V)
    xb = jnp.dot(x, bt_ref[...], preferred_element_type=jnp.float32) * scale  # (M, r)
    o_ref[...] = base + jnp.dot(xb, at_ref[...],
                                preferred_element_type=jnp.float32)        # (M, V)


def qpa_lora_head(x2d, w_head_t, a_t, b_t, scale):
    m = x2d.shape[0]
    v = w_head_t.shape[1]
    return pl.pallas_call(
        functools.partial(_lora_head_kernel, scale=float(scale)),
        out_shape=jax.ShapeDtypeStruct((m, v), jnp.float32),
        in_specs=[pl.BlockSpec(memory_space=pltpu.MemorySpace.VMEM)] * 4,
        out_specs=pl.BlockSpec(memory_space=pltpu.MemorySpace.VMEM),
    )(x2d, w_head_t, b_t, a_t)


# ------------------------- quantum layer (plain JAX glue) --------------------
# TODO(synk): torchquantum circuit has no Pallas equivalent; simulated here as a
# tiny real-valued statevector (2**3 amplitudes) in plain JAX.
def _apply_ry(state, theta, wire):
    c = jnp.cos(theta / 2.0)
    s = jnp.sin(theta / 2.0)
    m = jnp.stack([jnp.stack([c, -s]), jnp.stack([s, c])])
    st = jnp.moveaxis(state, wire, 0)
    st = jnp.tensordot(m, st, axes=([1], [0]))
    return jnp.moveaxis(st, 0, wire)


def _apply_cnot(state, ctrl, tgt):
    st = jnp.moveaxis(state, (ctrl, tgt), (0, 1))
    st = jnp.stack([st[0], st[1][::-1]], axis=0)
    return jnp.moveaxis(st, (0, 1), (ctrl, tgt))


def simulate_qlayer(ry_params, n_wires):
    dim = 2 ** n_wires
    state = jnp.zeros((dim,), jnp.float32).at[0].set(1.0).reshape((2,) * n_wires)
    n_blocks = ry_params.shape[0]
    for k in range(n_blocks):
        for w in range(n_wires):
            state = _apply_ry(state, ry_params[k, w], w)
        for w in range(n_wires - 1):  # Op2QAllLayer, circular=False
            state = _apply_cnot(state, w, w + 1)
    probs = state.reshape(dim) ** 2
    easy_scale_coeff = 2.0 ** (n_wires - 1)
    gamma, beta, alpha = 0.1, 0.6, 0.15
    x = (beta * jnp.tanh(gamma * easy_scale_coeff * probs)) ** alpha
    x = x - jnp.mean(x)
    return x


# ----------------------------- parameter init --------------------------------
def init_linear_t(key, out_f, in_f):
    """PyTorch nn.Linear init, stored pre-transposed: W^T (in,out), b (1,out)."""
    k1, k2 = jax.random.split(key)
    bound = 1.0 / math.sqrt(in_f)
    w = jax.random.uniform(k1, (out_f, in_f), jnp.float32, -bound, bound)
    b = jax.random.uniform(k2, (out_f,), jnp.float32, -bound, bound)
    return w.T, b.reshape(1, out_f)


def build_hypernet_params(key):
    keys = jax.random.split(key, 16)
    sizes = [N_QUBIT + 1, 32, 64, 128, 128, 64, 32]
    mapping = []
    for i in range(len(sizes) - 1):                       # input + hidden layers
        mapping.append(init_linear_t(keys[i], sizes[i + 1], sizes[i]))
    mapping.append(init_linear_t(keys[8], OUT_DIM_MPS, sizes[-1]))   # output_layer
    fc1_w_t, fc1_b = init_linear_t(keys[9], CHUNK_SIZE, OUT_DIM_MPS)  # (32,80),(1,80)
    # Zero-pad fc1 to 128 output lanes so the fused kernel's store is lane-dense.
    fc1_w_pad = jnp.zeros((OUT_DIM_MPS, LANE), jnp.float32).at[:, :CHUNK_SIZE].set(fc1_w_t)
    fc1_b_pad = jnp.zeros((1, LANE), jnp.float32).at[:, :CHUNK_SIZE].set(fc1_b)
    ry = jax.random.uniform(keys[10], (QNN_DEPTH, N_QUBIT), jnp.float32,
                            -math.pi, math.pi)
    # deterministic replica of generate_qubit_states_torch (seeded sampling)
    random.seed(0)
    idx = np.array(random.sample(range(2 ** N_QUBIT), HYPER_BATCH),
                   dtype=np.int64).reshape(HYPER_BATCH, 1)
    bits = ((idx & (1 << np.arange(N_QUBIT, dtype=np.int64))) > 0)
    qubit_states = jnp.asarray(bits.astype(np.float32) * 2.0 - 1.0)  # (8, 3)
    return dict(mapping=mapping, fc1_w_pad=fc1_w_pad, fc1_b_pad=fc1_b_pad,
                ry=ry, qubit_states=qubit_states)


def build_params(key):
    k_wte, k_wpe, k_hyp = jax.random.split(key, 3)
    wte = 0.02 * jax.random.normal(k_wte, (VOCAB, HIDDEN), jnp.float32)
    wpe = 0.02 * jax.random.normal(k_wpe, (SEQ, HIDDEN), jnp.float32)
    hypernets = [build_hypernet_params(k)
                 for k in jax.random.split(k_hyp, N_SUB_HYPERNET)]
    # GPT-2 ties lm_head weight to wte; original_layer has no bias. The head
    # kernel wants the (in, out) layout, so store wte^T once (forward-only, no
    # training, so the tie cannot go stale).
    lm_head = dict(w_head_t=wte.T, hypernets=hypernets)
    return dict(wte=wte, wpe=wpe, lm_head=lm_head)


# ------------------------------- forward passes ------------------------------
def qt_hypernet_forward(hp):
    probs = simulate_qlayer(hp["ry"], N_QUBIT)[:HYPER_BATCH].reshape(HYPER_BATCH, 1)
    combined = jnp.concatenate([hp["qubit_states"], probs], axis=1)  # (8, 4)
    out = fused_hypernet(combined, hp["mapping"], hp["fc1_w_pad"], hp["fc1_b_pad"])
    # drop the lane padding; flatten to the mean-subtracted generated weights
    return out[:, :CHUNK_SIZE].reshape(-1)[:WEIGHT_LENGTH]


def qpa_lora_layer_forward(x, layer_params):
    gen = [qt_hypernet_forward(hp) for hp in layer_params["hypernets"]]
    gw = jnp.concatenate(gen, axis=0).reshape(-1)[:GEN_LEN]
    # Layout plumbing on 2.5 KB of generated weights: present A^T / B^T so the
    # head kernel never transposes in VMEM.
    a_t = gw[:VOCAB * LORA_RANK].reshape(VOCAB, LORA_RANK).T     # (r, V)
    b_t = gw[VOCAB * LORA_RANK:].reshape(LORA_RANK, HIDDEN).T    # (H, r)
    bsz, seq, hid = x.shape
    x2d = x.reshape(-1, hid)              # dropout p=0.05 is identity in eval mode
    logits2d = qpa_lora_head(x2d, layer_params["w_head_t"], a_t, b_t,
                             LORA_ALPHA / LORA_RANK)
    return logits2d.reshape(bsz, seq, VOCAB)


def qpa_lora_gpt2_forward(params, input_ids, attention_mask, labels):
    # TODO(synk): full GPT-2 transformer blocks (attention/MLP/LayerNorm) are not
    # re-implemented; backbone stand-in = token + position embeddings.
    del attention_mask  # would be consumed by the attention stack
    hidden = params["wte"][input_ids] + params["wpe"][jnp.arange(input_ids.shape[1])]
    logits = qpa_lora_layer_forward(hidden, params["lm_head"])
    # GPT-2 LM loss: shifted cross-entropy (glue)
    shift_logits = logits[:, :-1, :]
    shift_labels = labels[:, 1:]
    logp = jax.nn.log_softmax(shift_logits, axis=-1)
    nll = -jnp.take_along_axis(logp, shift_labels[..., None], axis=-1)[..., 0]
    loss = jnp.mean(nll)
    return loss, logits


# ------------------------------------ main ------------------------------------
if __name__ == "__main__":
    key = jax.random.PRNGKey(0)
    k_params, k_ids, k_lbl = jax.random.split(key, 3)
    params = build_params(k_params)

    input_ids = jax.random.randint(k_ids, (BATCH, SEQ), 0, VOCAB, dtype=jnp.int32)
    attention_mask = jnp.ones((BATCH, SEQ), jnp.int32)
    labels = jax.random.randint(k_lbl, (BATCH, SEQ), 0, VOCAB, dtype=jnp.int32)

    loss, logits = qpa_lora_gpt2_forward(params, input_ids, attention_mask, labels)
    jax.block_until_ready((loss, logits))
    assert logits.shape == (BATCH, SEQ, VOCAB)
    assert jnp.isfinite(loss)
    print("KERNEL_OK")
</pallas_src>

<mosaic_0001>
module attributes {stable_mosaic.version = 11 : i64} {
  func.func @_hypernet_kernel(%arg0: memref<8x4xf32, #tpu.memory_space<vmem>>, %arg1: memref<4x32xf32, #tpu.memory_space<vmem>>, %arg2: memref<1x32xf32, #tpu.memory_space<vmem>>, %arg3: memref<32x64xf32, #tpu.memory_space<vmem>>, %arg4: memref<1x64xf32, #tpu.memory_space<vmem>>, %arg5: memref<64x128xf32, #tpu.memory_space<vmem>>, %arg6: memref<1x128xf32, #tpu.memory_space<vmem>>, %arg7: memref<128x128xf32, #tpu.memory_space<vmem>>, %arg8: memref<1x128xf32, #tpu.memory_space<vmem>>, %arg9: memref<128x64xf32, #tpu.memory_space<vmem>>, %arg10: memref<1x64xf32, #tpu.memory_space<vmem>>, %arg11: memref<64x32xf32, #tpu.memory_space<vmem>>, %arg12: memref<1x32xf32, #tpu.memory_space<vmem>>, %arg13: memref<32x32xf32, #tpu.memory_space<vmem>>, %arg14: memref<1x32xf32, #tpu.memory_space<vmem>>, %arg15: memref<32x128xf32, #tpu.memory_space<vmem>>, %arg16: memref<1x128xf32, #tpu.memory_space<vmem>>, %arg17: memref<8x128xf32, #tpu.memory_space<vmem>>) attributes {dimension_semantics = [], scalar_prefetch = 0 : i64, scratch_operands = 0 : i64, tpu.core_type = #tpu.core_type<tc>} {
    %c0 = arith.constant 0 : index
    %c0_0 = arith.constant 0 : index
    %0 = vector.load %arg0[%c0, %c0_0] : memref<8x4xf32, #tpu.memory_space<vmem>>, vector<8x4xf32>
    %c0_1 = arith.constant 0 : index
    %c0_2 = arith.constant 0 : index
    %1 = vector.load %arg1[%c0_1, %c0_2] : memref<4x32xf32, #tpu.memory_space<vmem>>, vector<4x32xf32>
    %cst = arith.constant dense<0.000000e+00> : vector<8x32xf32>
    %2 = tpu.matmul %0, %1, %cst {dimension_numbers = #tpu.dot_dimension_numbers<[1], [0], [0], [1], [0, 0, 1, 1], [], []>} : vector<8x4xf32>, vector<4x32xf32>, vector<8x32xf32> -> vector<8x32xf32>
    %c0_3 = arith.constant 0 : index
    %c0_4 = arith.constant 0 : index
    %3 = vector.load %arg2[%c0_3, %c0_4] : memref<1x32xf32, #tpu.memory_space<vmem>>, vector<1x32xf32>
    %4 = vector.broadcast %3 : vector<1x32xf32> to vector<8x32xf32>
    %5 = arith.addf %2, %4 : vector<8x32xf32>
    %c0_5 = arith.constant 0 : index
    %c0_6 = arith.constant 0 : index
    %6 = vector.load %arg3[%c0_5, %c0_6] : memref<32x64xf32, #tpu.memory_space<vmem>>, vector<32x64xf32>
    %cst_7 = arith.constant dense<0.000000e+00> : vector<8x64xf32>
    %7 = tpu.matmul %5, %6, %cst_7 {dimension_numbers = #tpu.dot_dimension_numbers<[1], [0], [0], [1], [0, 0, 1, 1], [], []>} : vector<8x32xf32>, vector<32x64xf32>, vector<8x64xf32> -> vector<8x64xf32>
    %c0_8 = arith.constant 0 : index
    %c0_9 = arith.constant 0 : index
    %8 = vector.load %arg4[%c0_8, %c0_9] : memref<1x64xf32, #tpu.memory_space<vmem>>, vector<1x64xf32>
    %9 = vector.broadcast %8 : vector<1x64xf32> to vector<8x64xf32>
    %10 = arith.addf %7, %9 : vector<8x64xf32>
    %c0_10 = arith.constant 0 : index
    %c0_11 = arith.constant 0 : index
    %11 = vector.load %arg5[%c0_10, %c0_11] : memref<64x128xf32, #tpu.memory_space<vmem>>, vector<64x128xf32>
    %cst_12 = arith.constant dense<0.000000e+00> : vector<8x128xf32>
    %12 = tpu.matmul %10, %11, %cst_12 {dimension_numbers = #tpu.dot_dimension_numbers<[1], [0], [0], [1], [0, 0, 1, 1], [], []>} : vector<8x64xf32>, vector<64x128xf32>, vector<8x128xf32> -> vector<8x128xf32>
    %c0_13 = arith.constant 0 : index
    %c0_14 = arith.constant 0 : index
    %13 = vector.load %arg6[%c0_13, %c0_14] : memref<1x128xf32, #tpu.memory_space<vmem>>, vector<1x128xf32>
    %14 = vector.broadcast %13 : vector<1x128xf32> to vector<8x128xf32>
    %15 = arith.addf %12, %14 : vector<8x128xf32>
    %c0_15 = arith.constant 0 : index
    %c0_16 = arith.constant 0 : index
    %16 = vector.load %arg7[%c0_15, %c0_16] : memref<128x128xf32, #tpu.memory_space<vmem>>, vector<128x128xf32>
    %cst_17 = arith.constant dense<0.000000e+00> : vector<8x128xf32>
    %17 = tpu.matmul %15, %16, %cst_17 {dimension_numbers = #tpu.dot_dimension_numbers<[1], [0], [0], [1], [0, 0, 1, 1], [], []>} : vector<8x128xf32>, vector<128x128xf32>, vector<8x128xf32> -> vector<8x128xf32>
    %c0_18 = arith.constant 0 : index
    %c0_19 = arith.constant 0 : index
    %18 = vector.load %arg8[%c0_18, %c0_19] : memref<1x128xf32, #tpu.memory_space<vmem>>, vector<1x128xf32>
    %19 = vector.broadcast %18 : vector<1x128xf32> to vector<8x128xf32>
    %20 = arith.addf %17, %19 : vector<8x128xf32>
    %c0_20 = arith.constant 0 : index
    %c0_21 = arith.constant 0 : index
    %21 = vector.load %arg9[%c0_20, %c0_21] : memref<128x64xf32, #tpu.memory_space<vmem>>, vector<128x64xf32>
    %cst_22 = arith.constant dense<0.000000e+00> : vector<8x64xf32>
    %22 = tpu.matmul %20, %21, %cst_22 {dimension_numbers = #tpu.dot_dimension_numbers<[1], [0], [0], [1], [0, 0, 1, 1], [], []>} : vector<8x128xf32>, vector<128x64xf32>, vector<8x64xf32> -> vector<8x64xf32>
    %c0_23 = arith.constant 0 : index
    %c0_24 = arith.constant 0 : index
    %23 = vector.load %arg10[%c0_23, %c0_24] : memref<1x64xf32, #tpu.memory_space<vmem>>, vector<1x64xf32>
    %24 = vector.broadcast %23 : vector<1x64xf32> to vector<8x64xf32>
    %25 = arith.addf %22, %24 : vector<8x64xf32>
    %c0_25 = arith.constant 0 : index
    %c0_26 = arith.constant 0 : index
    %26 = vector.load %arg11[%c0_25, %c0_26] : memref<64x32xf32, #tpu.memory_space<vmem>>, vector<64x32xf32>
    %cst_27 = arith.constant dense<0.000000e+00> : vector<8x32xf32>
    %27 = tpu.matmul %25, %26, %cst_27 {dimension_numbers = #tpu.dot_dimension_numbers<[1], [0], [0], [1], [0, 0, 1, 1], [], []>} : vector<8x64xf32>, vector<64x32xf32>, vector<8x32xf32> -> vector<8x32xf32>
    %c0_28 = arith.constant 0 : index
    %c0_29 = arith.constant 0 : index
    %28 = vector.load %arg12[%c0_28, %c0_29] : memref<1x32xf32, #tpu.memory_space<vmem>>, vector<1x32xf32>
    %29 = vector.broadcast %28 : vector<1x32xf32> to vector<8x32xf32>
    %30 = arith.addf %27, %29 : vector<8x32xf32>
    %c0_30 = arith.constant 0 : index
    %c0_31 = arith.constant 0 : index
    %31 = vector.load %arg13[%c0_30, %c0_31] : memref<32x32xf32, #tpu.memory_space<vmem>>, vector<32x32xf32>
    %cst_32 = arith.constant dense<0.000000e+00> : vector<8x32xf32>
    %32 = tpu.matmul %30, %31, %cst_32 {dimension_numbers = #tpu.dot_dimension_numbers<[1], [0], [0], [1], [0, 0, 1, 1], [], []>} : vector<8x32xf32>, vector<32x32xf32>, vector<8x32xf32> -> vector<8x32xf32>
    %c0_33 = arith.constant 0 : index
    %c0_34 = arith.constant 0 : index
    %33 = vector.load %arg14[%c0_33, %c0_34] : memref<1x32xf32, #tpu.memory_space<vmem>>, vector<1x32xf32>
    %34 = vector.broadcast %33 : vector<1x32xf32> to vector<8x32xf32>
    %35 = arith.addf %32, %34 : vector<8x32xf32>
    %c0_35 = arith.constant 0 : index
    %c0_36 = arith.constant 0 : index
    %36 = vector.load %arg15[%c0_35, %c0_36] : memref<32x128xf32, #tpu.memory_space<vmem>>, vector<32x128xf32>
    %cst_37 = arith.constant dense<0.000000e+00> : vector<8x128xf32>
    %37 = tpu.matmul %35, %36, %cst_37 {dimension_numbers = #tpu.dot_dimension_numbers<[1], [0], [0], [1], [0, 0, 1, 1], [], []>} : vector<8x32xf32>, vector<32x128xf32>, vector<8x128xf32> -> vector<8x128xf32>
    %c0_38 = arith.constant 0 : index
    %c0_39 = arith.constant 0 : index
    %38 = vector.load %arg16[%c0_38, %c0_39] : memref<1x128xf32, #tpu.memory_space<vmem>>, vector<1x128xf32>
    %39 = vector.broadcast %38 : vector<1x128xf32> to vector<8x128xf32>
    %40 = arith.addf %37, %39 : vector<8x128xf32>
    %41 = vector.shape_cast %40 : vector<8x128xf32> to vector<1x8x128xf32>
    %cst_40 = arith.constant dense<0.000000e+00> : vector<1xf32>
    %42 = vector.multi_reduction <add>, %41, %cst_40 [1, 2] : vector<1x8x128xf32> to vector<1xf32>
    %43 = vector.shape_cast %42 : vector<1xf32> to vector<1x1x1xf32>
    %44 = vector.extract %43[0, 0, 0] : f32 from vector<1x1x1xf32>
    %cst_41 = arith.constant 1.562500e-03 : f32
    %45 = arith.mulf %44, %cst_41 : f32
    %46 = vector.broadcast %45 : f32 to vector<8x128xf32>
    %47 = arith.subf %40, %46 : vector<8x128xf32>
    %c0_42 = arith.constant 0 : index
    %c0_43 = arith.constant 0 : index
    %48 = vector.load %arg17[%c0_42, %c0_43] : memref<8x128xf32, #tpu.memory_space<vmem>>, vector<8x128xf32>
    tpu.vector_store %arg17[%c0_42, %c0_43], %47 {strides = array<i32>} : memref<8x128xf32, #tpu.memory_space<vmem>>, vector<8x128xf32>,
    return
  }
}

</mosaic_0001>

<llo_original>
// kernel: tpu_custom_call.1
$region0: #{tpu_custom_call.1}
  #allocation0 [shape = 'u32[]', space=smem, size = 0x4, offset = 0x4, fixed_abs, tag = 'smem constant byte address 0x4 - core index']
  #allocation1 [shape = 'u32[72,128]{1,0:T(1,128)}', space=vmem, size = 0x9000, scoped, tag = 'internal scratch']
  %s0 = inlined_call_operand.vmem [shape: f32[8,4], index: 0, kind: input, shape index: {}]
  %s1 = inlined_call_operand.vmem [shape: f32[4,32], index: 1, kind: input, shape index: {}]
  %s2 = inlined_call_operand.vmem [shape: f32[1,32], index: 2, kind: input, shape index: {}]
  %s3 = inlined_call_operand.vmem [shape: f32[32,64], index: 3, kind: input, shape index: {}]
  %s4 = inlined_call_operand.vmem [shape: f32[1,64], index: 4, kind: input, shape index: {}]
  %s5 = inlined_call_operand.vmem [shape: f32[64,128], index: 5, kind: input, shape index: {}]
  %s6 = inlined_call_operand.vmem [shape: f32[1,128], index: 6, kind: input, shape index: {}]
  %s7 = inlined_call_operand.vmem [shape: f32[128,128], index: 7, kind: input, shape index: {}]
  %s8 = inlined_call_operand.vmem [shape: f32[1,128], index: 8, kind: input, shape index: {}]
  %s9 = inlined_call_operand.vmem [shape: f32[128,64], index: 9, kind: input, shape index: {}]
  %s10 = inlined_call_operand.vmem [shape: f32[1,64], index: 10, kind: input, shape index: {}]
  %s11 = inlined_call_operand.vmem [shape: f32[64,32], index: 11, kind: input, shape index: {}]
  %s12 = inlined_call_operand.vmem [shape: f32[1,32], index: 12, kind: input, shape index: {}]
  %s13 = inlined_call_operand.hbm [shape: f32[32,32], index: 13, kind: input, shape index: {}]
  %s14 = inlined_call_operand.vmem [shape: f32[1,32], index: 14, kind: input, shape index: {}]
  %s15 = inlined_call_operand.hbm [shape: f32[32,128], index: 15, kind: input, shape index: {}]
  %s16 = inlined_call_operand.vmem [shape: f32[1,128], index: 16, kind: input, shape index: {}]
  %s17 = inlined_call_operand.hbm [shape: f32[8,128], index: 17, kind: output, shape index: {}]
  %s18 = sld [smem:[#allocation0]]
  $region86: #{tpu_custom_call.1} parent=0
    _
  %s20 = ssub.s32 1, %s18
  %s21 = scalar_select 0, %s20, %s18
  $region1: #{tpu_custom_call.1} parent=0
    #allocation2 [shape = 'u8[16384]{0}', space=vmem, size = 0x4000, scoped, tag = 'input window, operand 13, single buffered']
    #allocation3 [shape = 's32[1]{0}', space=sflag, size = 0x4, scoped, tag = 'scoped memory for tpu_custom_call.1']
    #allocation4 [shape = 's32[1]{0}', space=sflag, size = 0x4, scoped, tag = 'scoped memory for tpu_custom_call.1']
    #allocation5 [shape = 'u8[16384]{0}', space=vmem, size = 0x4000, scoped, tag = 'input window, operand 15, single buffered']
    #allocation6 [shape = 's32[1]{0}', space=sflag, size = 0x4, scoped, tag = 'scoped memory for tpu_custom_call.1']
    #allocation7 [shape = 'u8[4096]{0}', space=vmem, size = 0x1000, scoped, tag = 'output window, operand 0, single buffered']
    %22 = vsyncpa [#allocation3], 0
    %23 = vsyncpa [#allocation6], 0
    %24 = vsyncpa [#allocation4], 0
    // Predicated region
    $region2: #{tpu_custom_call.1} parent=1 // pred_check
      _
    $region3: #{tpu_custom_call.1} parent=1 // pred_check_branch
      %26 = sbr.rel (0) target = $region5
    $region4: #{tpu_custom_call.1} parent=1 // pred_region
      _
    $region5: #{tpu_custom_call.1} parent=1 // pred_fallthru
      _
    // Predicated region
    $region6: #{tpu_custom_call.1} parent=1 // pred_check
      _
    $region7: #{tpu_custom_call.1} parent=1 // pred_check_branch
      %28 = sbr.rel (0) target = $region9
    $region8: #{tpu_custom_call.1} parent=1 // pred_region
      _
    $region9: #{tpu_custom_call.1} parent=1 // pred_fallthru
      _
    // Predicated region
    $region10: #{tpu_custom_call.1} parent=1 // pred_check
      _
    $region11: #{tpu_custom_call.1} parent=1 // pred_check_branch
      %30 = sbr.rel (0) target = $region13
    $region12: #{tpu_custom_call.1} parent=1 // pred_region
      _
    $region13: #{tpu_custom_call.1} parent=1 // pred_fallthru
      _
    // Predicated region
    $region14: #{tpu_custom_call.1} parent=1 // pred_check
      _
    $region15: #{tpu_custom_call.1} parent=1 // pred_check_branch
      %32 = sbr.rel (0) target = $region17
    $region16: #{tpu_custom_call.1} parent=1 // pred_region
      _
    $region17: #{tpu_custom_call.1} parent=1 // pred_fallthru
      _
    // Predicated region
    $region18: #{tpu_custom_call.1} parent=1 // pred_check
      _
    $region19: #{tpu_custom_call.1} parent=1 // pred_check_branch
      %34 = sbr.rel (0) target = $region21
    $region20: #{tpu_custom_call.1} parent=1 // pred_region
      _
    $region21: #{tpu_custom_call.1} parent=1 // pred_fallthru
      _
    // Predicated region
    $region22: #{tpu_custom_call.1} parent=1 // pred_check
      _
    $region23: #{tpu_custom_call.1} parent=1 // pred_check_branch
      %36 = sbr.rel (0) target = $region25
    $region24: #{tpu_custom_call.1} parent=1 // pred_region
      _
    $region25: #{tpu_custom_call.1} parent=1 // pred_fallthru
      _
    // Predicated region
    $region26: #{tpu_custom_call.1} parent=1 // pred_check
      _
    $region27: #{tpu_custom_call.1} parent=1 // pred_check_branch
      %38 = sbr.rel (0) target = $region29
    $region28: #{tpu_custom_call.1} parent=1 // pred_region
      _
    $region29: #{tpu_custom_call.1} parent=1 // pred_fallthru
      _
    // Predicated region
    $region30: #{tpu_custom_call.1} parent=1 // pred_check
      _
    $region31: #{tpu_custom_call.1} parent=1 // pred_check_branch
      %40 = sbr.rel (0) target = $region33
    $region32: #{tpu_custom_call.1} parent=1 // pred_region
      _
    $region33: #{tpu_custom_call.1} parent=1 // pred_fallthru
      _
    // Predicated region
    $region34: #{tpu_custom_call.1} parent=1 // pred_check
      _
    $region35: #{tpu_custom_call.1} parent=1 // pred_check_branch
      %42 = sbr.rel (0) target = $region37
    $region36: #{tpu_custom_call.1} parent=1 // pred_region
      _
    $region37: #{tpu_custom_call.1} parent=1 // pred_fallthru
      _
    // Predicated region
    $region38: #{tpu_custom_call.1} parent=1 // pred_check
      _
    $region39: #{tpu_custom_call.1} parent=1 // pred_check_branch
      %44 = sbr.rel (0) target = $region41
    $region40: #{tpu_custom_call.1} parent=1 // pred_region
      _
    $region41: #{tpu_custom_call.1} parent=1 // pred_fallthru
      _
    // Predicated region
    $region42: #{tpu_custom_call.1} parent=1 // pred_check
      _
    $region43: #{tpu_custom_call.1} parent=1 // pred_check_branch
      %46 = sbr.rel (0) target = $region45
    $region44: #{tpu_custom_call.1} parent=1 // pred_region
      _
    $region45: #{tpu_custom_call.1} parent=1 // pred_fallthru
      _
    // Predicated region
    $region46: #{tpu_custom_call.1} parent=1 // pred_check
      _
    $region47: #{tpu_custom_call.1} parent=1 // pred_check_branch
      %48 = sbr.rel (0) target = $region49
    $region48: #{tpu_custom_call.1} parent=1 // pred_region
      _
    $region49: #{tpu_custom_call.1} parent=1 // pred_fallthru
      _
    // Predicated region
    $region50: #{tpu_custom_call.1} parent=1 // pred_check
      _
    $region51: #{tpu_custom_call.1} parent=1 // pred_check_branch
      %50 = sbr.rel (0) target = $region53
    $region52: #{tpu_custom_call.1} parent=1 // pred_region
      _
    $region53: #{tpu_custom_call.1} parent=1 // pred_fallthru
      _
    // Predicated region
    $region54: #{tpu_custom_call.1} parent=1 // pred_check
      _
    $region55: #{tpu_custom_call.1} parent=1 // pred_check_branch
      %52 = sbr.rel (0) target = $region57
    $region56: #{tpu_custom_call.1} parent=1 // pred_region
      %54 = vsyncadd [#allocation3], 0
      %s55 = sshll.u32 %s13, 4
      %s56 = int_to_ptr.hbm [resolvable:$true] %s55
      %s57 = sshll.u32 [#allocation2], 4
      %s58 = int_to_ptr.vmem [resolvable:$true] %s57
      %63 = dma.hbm_to_vmem [thread:$0]  %s56, 512, %s58, [#allocation3], 128, 128, 8
    $region57: #{tpu_custom_call.1} parent=1 // pred_fallthru
      _
    // Predicated region
    $region58: #{tpu_custom_call.1} parent=1 // pred_check
      _
    $region59: #{tpu_custom_call.1} parent=1 // pred_check_branch
      %65 = sbr.rel (0) target = $region61
    $region60: #{tpu_custom_call.1} parent=1 // pred_region
      _
    $region61: #{tpu_custom_call.1} parent=1 // pred_fallthru
      _
    // Predicated region
    $region62: #{tpu_custom_call.1} parent=1 // pred_check
      _
    $region63: #{tpu_custom_call.1} parent=1 // pred_check_branch
      %67 = sbr.rel (0) target = $region65
    $region64: #{tpu_custom_call.1} parent=1 // pred_region
      %69 = vsyncadd [#allocation6], 0
      %s70 = sshll.u32 %s15, 4
      %s71 = int_to_ptr.hbm [resolvable:$true] %s70
      %s72 = sshll.u32 [#allocation5], 4
      %s73 = int_to_ptr.vmem [resolvable:$true] %s72
      %78 = dma.hbm_to_vmem [thread:$0]  %s71, 512, %s73, [#allocation6], 128, 128, 8
    $region65: #{tpu_custom_call.1} parent=1 // pred_fallthru
      _
    // Predicated region
    $region66: #{tpu_custom_call.1} parent=1 // pred_check
      _
    $region67: #{tpu_custom_call.1} parent=1 // pred_check_branch
      %80 = sbr.rel (0) target = $region69
    $region68: #{tpu_custom_call.1} parent=1 // pred_region
      _
    $region69: #{tpu_custom_call.1} parent=1 // pred_fallthru
      _
    // Predicated region
    $region70: #{tpu_custom_call.1} parent=1 // pred_check
      _
    $region71: #{tpu_custom_call.1} parent=1 // pred_check_branch
      %82 = sbr.rel (0) target = $region73
    $region72: #{tpu_custom_call.1} parent=1 // pred_region
      %84 = dma.done [#allocation3], 512
    $region73: #{tpu_custom_call.1} parent=1 // pred_fallthru
      _
    // Predicated region
    $region74: #{tpu_custom_call.1} parent=1 // pred_check
      _
    $region75: #{tpu_custom_call.1} parent=1 // pred_check_branch
      %86 = sbr.rel (0) target = $region77
    $region76: #{tpu_custom_call.1} parent=1 // pred_region
      %88 = dma.done [#allocation6], 512
    $region77: #{tpu_custom_call.1} parent=1 // pred_fallthru
      _
    %v89 = vld [vmem:[%s0] sm:$0xff]
    %v90 = vld [vmem:[%s1] sm:$0xf]
    %v91 = vld [vmem:[%s2] sm:$0x1]
    %v93 = vperm.slane %v91, 0
    %vm95 = vcmask 31744
    %v97 = vsel %vm95, %v89, 0
    %vm99 = vcmask 1043456
    %v101 = vsel %vm99, %v90, 0
    %103 = vmatpush.msra.mxu0 0.0
    %104 = vmatpush.msra.mxu0 0.0
    %105 = vmatpush.msra.mxu0 0.0
    %106 = vmatpush.msra.mxu0 0.0
    %107 = vmatpush.msra.mxu0 0.0
    %108 = vmatpush.msra.mxu0 0.0
    %109 = vmatpush.msra.mxu0 0.0
    %110 = vmatpush.msra.mxu0 0.0
    %111 = vmatpush.msra.mxu0 0.0
    %112 = vmatpush.msra.mxu0 0.0
    %113 = vmatpush.msra.mxu0 0.0
    %114 = vmatpush.msra.mxu0 0.0
    %115 = vmatpush.msra.mxu0 0.0
    %116 = vmatpush.msra.mxu0 0.0
    %117 = vmatpush.msra.mxu0 0.0
    %118 = vmatpush.msra.mxu0 %v101
    %119 = vmatmul.f32.gmra.mxu0 %v97
    %v120 = vpop.f32.mrf.mxu0
    %v121 = vadd.f32 %v93, %v120
    %122 = vdwg.mxu0
    %v123 = vld [vmem:[%s3] sm:$0xff]
    %v124 = vld [vmem:[%s3 + $0x8] sm:$0xff]
    %v125 = vld [vmem:[%s3 + $0x10] sm:$0xff]
    %v126 = vld [vmem:[%s3 + $0x18] sm:$0xff]
    %v127 = vld [vmem:[%s4] sm:$0x1]
    %v129 = vperm.slane %v127, 0
    %vm131 = vcmask 261120
    %v133 = vsel %vm131, %v121, 0
    %135 = vmatpush.msra.mxu0 0.0
    %136 = vmatpush.msra.mxu0 0.0
    %137 = vmatpush.msra.mxu0 0.0
    %138 = vmatpush.msra.mxu0 0.0
    %139 = vmatpush.msra.mxu0 0.0
    %140 = vmatpush.msra.mxu0 0.0
    %141 = vmatpush.msra.mxu0 0.0
    %142 = vmatpush.msra.mxu0 0.0
    %143 = vmatpush.msra.mxu0 0.0
    %144 = vmatpush.msra.mxu0 0.0
    %145 = vmatpush.msra.mxu0 0.0
    %146 = vmatpush.msra.mxu0 0.0
    %147 = vmatpush.msra.mxu0 %v126
    %148 = vmatpush.msra.mxu0 %v125
    %149 = vmatpush.msra.mxu0 %v124
    %150 = vmatpush.msra.mxu0 %v123
    %151 = vmatmul.f32.gmra.mxu0 %v133
    %v152 = vpop.f32.mrf.mxu0
    %v153 = vadd.f32 %v129, %v152
    %154 = vdwg.mxu0
    %v155 = vld [vmem:[%s5] sm:$0xff]
    %v156 = vld [vmem:[%s5 + $0x8] sm:$0xff]
    %v157 = vld [vmem:[%s5 + $0x10] sm:$0xff]
    %v158 = vld [vmem:[%s5 + $0x18] sm:$0xff]
    %v159 = vld [vmem:[%s5 + $0x20] sm:$0xff]
    %v160 = vld [vmem:[%s5 + $0x28] sm:$0xff]
    %v161 = vld [vmem:[%s5 + $0x30] sm:$0xff]
    %v162 = vld [vmem:[%s5 + $0x38] sm:$0xff]
    %v163 = vld [vmem:[%s6] sm:$0x1]
    %v165 = vperm.slane %v163, 0
    %vm167 = vcmask 523264
    %v169 = vsel %vm167, %v153, 0
    %171 = vmatpush.msra.mxu0 0.0
    %172 = vmatpush.msra.mxu0 0.0
    %173 = vmatpush.msra.mxu0 0.0
    %174 = vmatpush.msra.mxu0 0.0
    %175 = vmatpush.msra.mxu0 0.0
    %176 = vmatpush.msra.mxu0 0.0
    %177 = vmatpush.msra.mxu0 0.0
    %178 = vmatpush.msra.mxu0 0.0
    %179 = vmatpush.msra.mxu0 %v162
    %180 = vmatpush.msra.mxu0 %v161
    %181 = vmatpush.msra.mxu0 %v160
    %182 = vmatpush.msra.mxu0 %v159
    %183 = vmatpush.msra.mxu0 %v158
    %184 = vmatpush.msra.mxu0 %v157
    %185 = vmatpush.msra.mxu0 %v156
    %186 = vmatpush.msra.mxu0 %v155
    %187 = vmatmul.f32.gmra.mxu0 %v169
    %v188 = vpop.f32.mrf.mxu0
    %v189 = vadd.f32 %v165, %v188
    %190 = vdwg.mxu0
    %v191 = vld [vmem:[%s7] sm:$0xff]
    %v192 = vld [vmem:[%s7 + $0x8] sm:$0xff]
    %v193 = vld [vmem:[%s7 + $0x10] sm:$0xff]
    %v194 = vld [vmem:[%s7 + $0x18] sm:$0xff]
    %v195 = vld [vmem:[%s7 + $0x20] sm:$0xff]
    %v196 = vld [vmem:[%s7 + $0x28] sm:$0xff]
    %v197 = vld [vmem:[%s7 + $0x30] sm:$0xff]
    %v198 = vld [vmem:[%s7 + $0x38] sm:$0xff]
    %v199 = vld [vmem:[%s7 + $0x40] sm:$0xff]
    %v200 = vld [vmem:[%s7 + $0x48] sm:$0xff]
    %v201 = vld [vmem:[%s7 + $0x50] sm:$0xff]
    %v202 = vld [vmem:[%s7 + $0x58] sm:$0xff]
    %v203 = vld [vmem:[%s7 + $0x60] sm:$0xff]
    %v204 = vld [vmem:[%s7 + $0x68] sm:$0xff]
    %v205 = vld [vmem:[%s7 + $0x70] sm:$0xff]
    %v206 = vld [vmem:[%s7 + $0x78] sm:$0xff]
    %v207 = vld [vmem:[%s8] sm:$0x1]
    %v209 = vperm.slane %v207, 0
    %211 = vmatpush.msra.mxu0 %v206
    %212 = vmatpush.msra.mxu0 %v205
    %213 = vmatpush.msra.mxu0 %v204
    %214 = vmatpush.msra.mxu0 %v203
    %215 = vmatpush.msra.mxu0 %v202
    %216 = vmatpush.msra.mxu0 %v201
    %217 = vmatpush.msra.mxu0 %v200
    %218 = vmatpush.msra.mxu0 %v199
    %219 = vmatpush.msra.mxu0 %v198
    %220 = vmatpush.msra.mxu0 %v197
    %221 = vmatpush.msra.mxu0 %v196
    %222 = vmatpush.msra.mxu0 %v195
    %223 = vmatpush.msra.mxu0 %v194
    %224 = vmatpush.msra.mxu0 %v193
    %225 = vmatpush.msra.mxu0 %v192
    %226 = vmatpush.msra.mxu0 %v191
    %227 = vmatmul.f32.gmra.mxu0 %v189
    %v228 = vpop.f32.mrf.mxu0
    %v229 = vadd.f32 %v209, %v228
    %230 = vdwg.mxu0
    %v231 = vld [vmem:[%s9] sm:$0xff]
    %v232 = vld [vmem:[%s9 + $0x8] sm:$0xff]
    %v233 = vld [vmem:[%s9 + $0x10] sm:$0xff]
    %v234 = vld [vmem:[%s9 + $0x18] sm:$0xff]
    %v235 = vld [vmem:[%s9 + $0x20] sm:$0xff]
    %v236 = vld [vmem:[%s9 + $0x28] sm:$0xff]
    %v237 = vld [vmem:[%s9 + $0x30] sm:$0xff]
    %v238 = vld [vmem:[%s9 + $0x38] sm:$0xff]
    %v239 = vld [vmem:[%s9 + $0x40] sm:$0xff]
    %v240 = vld [vmem:[%s9 + $0x48] sm:$0xff]
    %v241 = vld [vmem:[%s9 + $0x50] sm:$0xff]
    %v242 = vld [vmem:[%s9 + $0x58] sm:$0xff]
    %v243 = vld [vmem:[%s9 + $0x60] sm:$0xff]
    %v244 = vld [vmem:[%s9 + $0x68] sm:$0xff]
    %v245 = vld [vmem:[%s9 + $0x70] sm:$0xff]
    %v246 = vld [vmem:[%s9 + $0x78] sm:$0xff]
    %v247 = vld [vmem:[%s10] sm:$0x1]
    %v249 = vperm.slane %v247, 0
    %251 = vmatpush.msra.mxu0 %v246
    %252 = vmatpush.msra.mxu0 %v245
    %253 = vmatpush.msra.mxu0 %v244
    %254 = vmatpush.msra.mxu0 %v243
    %255 = vmatpush.msra.mxu0 %v242
    %256 = vmatpush.msra.mxu0 %v241
    %257 = vmatpush.msra.mxu0 %v240
    %258 = vmatpush.msra.mxu0 %v239
    %259 = vmatpush.msra.mxu0 %v238
    %260 = vmatpush.msra.mxu0 %v237
    %261 = vmatpush.msra.mxu0 %v236
    %262 = vmatpush.msra.mxu0 %v235
    %263 = vmatpush.msra.mxu0 %v234
    %264 = vmatpush.msra.mxu0 %v233
    %265 = vmatpush.msra.mxu0 %v232
    %266 = vmatpush.msra.mxu0 %v231
    %267 = vmatmul.f32.gmra.mxu0 %v229
    %v268 = vpop.f32.mrf.mxu0
    %v269 = vadd.f32 %v249, %v268
    %270 = vdwg.mxu0
    %v271 = vld [vmem:[%s11] sm:$0xff]
    %v272 = vld [vmem:[%s11 + $0x8] sm:$0xff]
    %v273 = vld [vmem:[%s11 + $0x10] sm:$0xff]
    %v274 = vld [vmem:[%s11 + $0x18] sm:$0xff]
    %v275 = vld [vmem:[%s11 + $0x20] sm:$0xff]
    %v276 = vld [vmem:[%s11 + $0x28] sm:$0xff]
    %v277 = vld [vmem:[%s11 + $0x30] sm:$0xff]
    %v278 = vld [vmem:[%s11 + $0x38] sm:$0xff]
    %v279 = vld [vmem:[%s12] sm:$0x1]
    %v281 = vperm.slane %v279, 0
    %v284 = vsel %vm167, %v269, 0
    %286 = vmatpush.msra.mxu0 0.0
    %287 = vmatpush.msra.mxu0 0.0
    %288 = vmatpush.msra.mxu0 0.0
    %289 = vmatpush.msra.mxu0 0.0
    %290 = vmatpush.msra.mxu0 0.0
    %291 = vmatpush.msra.mxu0 0.0
    %292 = vmatpush.msra.mxu0 0.0
    %293 = vmatpush.msra.mxu0 0.0
    %294 = vmatpush.msra.mxu0 %v278
    %295 = vmatpush.msra.mxu0 %v277
    %296 = vmatpush.msra.mxu0 %v276
    %297 = vmatpush.msra.mxu0 %v275
    %298 = vmatpush.msra.mxu0 %v274
    %299 = vmatpush.msra.mxu0 %v273
    %300 = vmatpush.msra.mxu0 %v272
    %301 = vmatpush.msra.mxu0 %v271
    %302 = vmatmul.f32.gmra.mxu0 %v284
    %v303 = vpop.f32.mrf.mxu0
    %v304 = vadd.f32 %v281, %v303
    %305 = vdwg.mxu0
    %v306 = vld [vmem:[#allocation2] sm:$0xff]
    %v307 = vld [vmem:[#allocation2 + $0x8] sm:$0xff]
    %v308 = vld [vmem:[#allocation2 + $0x10] sm:$0xff]
    %v309 = vld [vmem:[#allocation2 + $0x18] sm:$0xff]
    %v310 = vld [vmem:[%s14] sm:$0x1]
    %v312 = vperm.slane %v310, 0
    %v315 = vsel %vm131, %v304, 0
    %317 = vmatpush.msra.mxu0 0.0
    %318 = vmatpush.msra.mxu0 0.0
    %319 = vmatpush.msra.mxu0 0.0
    %320 = vmatpush.msra.mxu0 0.0
    %321 = vmatpush.msra.mxu0 0.0
    %322 = vmatpush.msra.mxu0 0.0
    %323 = vmatpush.msra.mxu0 0.0
    %324 = vmatpush.msra.mxu0 0.0
    %325 = vmatpush.msra.mxu0 0.0
    %326 = vmatpush.msra.mxu0 0.0
    %327 = vmatpush.msra.mxu0 0.0
    %328 = vmatpush.msra.mxu0 0.0
    %329 = vmatpush.msra.mxu0 %v309
    %330 = vmatpush.msra.mxu0 %v308
    %331 = vmatpush.msra.mxu0 %v307
    %332 = vmatpush.msra.mxu0 %v306
    %333 = vmatmul.f32.gmra.mxu0 %v315
    %v334 = vpop.f32.mrf.mxu0
    %v335 = vadd.f32 %v312, %v334
    %336 = vdwg.mxu0
    %v337 = vld [vmem:[#allocation5] sm:$0xff]
    %v338 = vld [vmem:[#allocation5 + $0x8] sm:$0xff]
    %v339 = vld [vmem:[#allocation5 + $0x10] sm:$0xff]
    %v340 = vld [vmem:[#allocation5 + $0x18] sm:$0xff]
    %v341 = vld [vmem:[%s16] sm:$0x1]
    %v343 = vperm.slane %v341, 0
    %v346 = vsel %vm131, %v335, 0
    %348 = vmatpush.msra.mxu0 0.0
    %349 = vmatpush.msra.mxu0 0.0
    %350 = vmatpush.msra.mxu0 0.0
    %351 = vmatpush.msra.mxu0 0.0
    %352 = vmatpush.msra.mxu0 0.0
    %353 = vmatpush.msra.mxu0 0.0
    %354 = vmatpush.msra.mxu0 0.0
    %355 = vmatpush.msra.mxu0 0.0
    %356 = vmatpush.msra.mxu0 0.0
    %357 = vmatpush.msra.mxu0 0.0
    %358 = vmatpush.msra.mxu0 0.0
    %359 = vmatpush.msra.mxu0 0.0
    %360 = vmatpush.msra.mxu0 %v340
    %361 = vmatpush.msra.mxu0 %v339
    %362 = vmatpush.msra.mxu0 %v338
    %363 = vmatpush.msra.mxu0 %v337
    %364 = vmatmul.f32.gmra.mxu0 %v346
    %v365 = vpop.f32.mrf.mxu0
    %v366 = vadd.f32 %v343, %v365
    %367 = vdwg.mxu0
    %368 = vadd.xlane.f32.xlu0 %v366
    %v369 = vpop.xlane.xlu0 %368
    %v370 = vrot.slane %v369, 4
    %v371 = vadd.f32 %v369, %v370
    %v372 = vrot.slane %v371, 2
    %v373 = vadd.f32 %v371, %v372
    %v374 = vrot.slane %v373, 1
    %v375 = vadd.f32 %v373, %v374
    %s376 = vtos %v375
    %s377 = smul.f32 %s376, 0.0015625
    %v378 = vstv %s377
    %v379 = vsub.f32 %v366, %v378
    %380 = vst [vmem:[#allocation7] sm:$0xff] %v379
    // Predicated region
    $region78: #{tpu_custom_call.1} parent=1 // pred_check
      _
    $region79: #{tpu_custom_call.1} parent=1 // pred_check_branch
      %382 = sbr.rel (0) target = $region81
    $region80: #{tpu_custom_call.1} parent=1 // pred_region
      %384 = vsyncadd [#allocation4], 0
      %s386 = sshll.u32 [#allocation7], 4
      %s387 = int_to_ptr.vmem [resolvable:$true] %s386
      %s388 = sshll.u32 %s17, 4
      %s389 = int_to_ptr.hbm [resolvable:$true] %s388
      %391 = dma.vmem_to_hbm [thread:$0]  %s387, 128, %s389, [#allocation4]
    $region81: #{tpu_custom_call.1} parent=1 // pred_fallthru
      _
    // Predicated region
    $region82: #{tpu_custom_call.1} parent=1 // pred_check
      _
    $region83: #{tpu_custom_call.1} parent=1 // pred_check_branch
      %393 = sbr.rel (0) target = $region85
    $region84: #{tpu_custom_call.1} parent=1 // pred_region
      %395 = dma.done [#allocation4], 128
    $region85: #{tpu_custom_call.1} parent=1 // pred_fallthru
      _
    %396 = vsyncpa [#allocation3], 1
    %397 = vsyncpa [#allocation6], 1
    %398 = vsyncpa [#allocation4], 1

</llo_original>
